<compile_context>
chip_gen: v6e
topology: v6e:2x2x1
jax: 0.10.0
libtpu: 0.0.40
codegen_flags: <defaults>
</compile_context>

<pallas_src>
import functools
import numpy as np

import jax
import jax.numpy as jnp
from jax import lax
from jax.experimental import pallas as pl
from jax.experimental.pallas import tpu as pltpu


# ---------------------------------------------------------------------------
# Kernel A: 3x3 max-pool NMS (stride 1, -inf border), separable max via rolls
# ---------------------------------------------------------------------------
def _nms_kernel(hm_ref, out_ref, *, H):
    x = hm_ref[0]                                          # (c_tile*H, W)
    CH, W = x.shape
    neg = jnp.array(-jnp.inf, dtype=x.dtype)

    col = lax.broadcasted_iota(jnp.int32, (1, W), 1)       # lane index
    row = lax.broadcasted_iota(jnp.int32, (CH, 1), 0) % H  # row index within a channel

    # horizontal neighbours: lane rolls on the XLU, edges masked to -inf
    left = jnp.where(col == 0, neg, pltpu.roll(x, 1, axis=1))            # x[:, j-1]
    right = jnp.where(col == W - 1, neg, pltpu.roll(x, W - 1, axis=1))   # x[:, j+1]
    hmax = jnp.maximum(jnp.maximum(left, right), x)

    # vertical neighbours: sublane rolls; `row % H` masks both the tile
    # border and channel boundaries of the flattened (c_tile*H) axis.
    up = jnp.where(row == 0, neg, pltpu.roll(hmax, 1, axis=0))             # hmax[i-1]
    down = jnp.where(row == H - 1, neg, pltpu.roll(hmax, CH - 1, axis=0))  # hmax[i+1]
    m = jnp.maximum(jnp.maximum(up, down), hmax)

    keep = (m == x).astype(x.dtype)
    out_ref[0] = x * keep


def _pick_c_tile(B, C, H, W, itemsize, budget_bytes=4 << 20, min_grid_steps=4):
    """Largest channel tile whose (c_tile*H, W) block stays under ~4 MiB,
    shrunk (if possible) so B*(C/c_tile) >= 4 grid steps for megacore."""
    if H % 8 != 0:
        # A (c_tile*H, W) block with c_tile < C would break the (8,128)
        # block-shape rule on the sublane dim; fall back to the full channel
        # axis (block dim == full array dim is always legal).
        return C
    per_ch = max(1, H * W * itemsize)
    fits = [d for d in range(1, C + 1) if C % d == 0 and d * per_ch <= budget_bytes]
    if not fits:
        return 1
    ct = max(fits)
    while ct > 1 and B * (C // ct) < min_grid_steps:
        smaller = [d for d in fits if d < ct]
        if not smaller:
            break
        ct = max(smaller)
    return ct


def nms_heatmap(heatmap):
    """torch: heatmap * (max_pool2d(heatmap, 3, 1, 1) == heatmap)."""
    B, C, H, W = heatmap.shape
    c_tile = _pick_c_tile(B, C, H, W, heatmap.dtype.itemsize)
    hm2d = heatmap.reshape(B, C * H, W)                    # free contiguous view
    out = pl.pallas_call(
        functools.partial(_nms_kernel, H=H),
        out_shape=jax.ShapeDtypeStruct((B, C * H, W), heatmap.dtype),
        grid=(B, C // c_tile),
        in_specs=[pl.BlockSpec((1, c_tile * H, W), lambda bb, cc: (bb, cc, 0))],
        out_specs=pl.BlockSpec((1, c_tile * H, W), lambda bb, cc: (bb, cc, 0)),
        compiler_params=pltpu.CompilerParams(
            dimension_semantics=("parallel", "parallel"),
            vmem_limit_bytes=32 * 1024 * 1024),
    )(hm2d)
    return out.reshape(B, C, H, W)
    # TODO(synk): when W < 128 a channels-in-lanes (NHWC) tiling would restore
    # lane density; for the standard TTFNet W=128 head this layout is already
    # lane-dense, so the simpler layout is kept.


# ---------------------------------------------------------------------------
# Kernel B: gather wh at top-k positions, ltrb->x1y1x2y2 decode, threshold,
#           prefix fill into one packed lane-dense (8, M) output per image.
# Row layout of the packed output: 0=score, 1=class, 2..5=x1,y1,x2,y2, 6..7=pad
# ---------------------------------------------------------------------------
def _select_decode_kernel(wh_ref, s_ref, c_ref, ys_ref, xs_ref, out_ref,
                          *, H, stride, score_thresh):
    W = wh_ref.shape[2]
    K = s_ref.shape[2]
    M = out_ref.shape[2]

    wh2d = wh_ref[0]                                       # (4*H, W) native dtype
    px = xs_ref[0]                                         # (1, K) int32
    py = ys_ref[0]                                         # (1, K) int32

    # Gather wh[c, py_k, px_k]: one one-hot matmul over W (MXU, f32 acc),
    # then a per-channel sublane reduce against the H one-hot.
    oh_x = (lax.broadcasted_iota(jnp.int32, (W, K), 0) == px).astype(wh2d.dtype)
    rows = jnp.dot(wh2d, oh_x, preferred_element_type=jnp.float32)      # (4H, K)
    oh_y = (lax.broadcasted_iota(jnp.int32, (H, K), 0) == py).astype(jnp.float32)
    parts = [jnp.sum(rows[c * H:(c + 1) * H, :] * oh_y, axis=0, keepdims=True)
             for c in range(4)]                                          # 4 x (1, K)
    ltrb = jnp.concatenate(parts, axis=0)                                # (4, K)

    # ltrb -> x1,y1,x2,y2, matching snap_ltrb_to_x1y1x2y2 followed by .int()
    pxf = px.astype(jnp.float32)
    pyf = py.astype(jnp.float32)
    row_id = lax.broadcasted_iota(jnp.int32, (4, K), 0)
    pos = jnp.where(row_id % 2 == 0, pxf, pyf)                           # x,y,x,y
    sign = jnp.where(row_id < 2, -1.0, 1.0)                              # -,-,+,+
    boxes = jnp.trunc((pos + sign * jnp.exp(ltrb)) * stride)             # (4, K)

    # Score threshold -> prefix fill (top-k scores are sorted descending, so
    # threshold-passing entries form a prefix; matches the torch loop).
    scores = s_ref[0]                                                    # (1, K)
    classes = c_ref[0]                                                   # (1, K)
    mask = scores > score_thresh
    sel_s = jnp.where(mask, scores, -1.0)
    sel_c = jnp.where(mask, classes, -1.0)
    sel_b = jnp.where(mask, boxes, 0.0)

    packed = jnp.concatenate(
        [sel_s, sel_c, sel_b, jnp.zeros((2, K), jnp.float32)], axis=0)   # (8, K)
    if K >= M:
        out_ref[0] = packed[:, :M]
    else:
        pad_row = lax.broadcasted_iota(jnp.int32, (8, M - K), 0)
        pad = jnp.where(pad_row < 2, -1.0, 0.0).astype(jnp.float32)
        out_ref[0] = jnp.concatenate([packed, pad], axis=1)


def select_decode(wh_heads, topk_scores, topk_classes, topk_ys, topk_xs,
                  stride, score_thresh, max_object_num):
    B, _, H, W = wh_heads.shape
    K = topk_scores.shape[1]
    M = max_object_num
    wh_r = wh_heads.reshape(B, 4 * H, W)                   # free view, native dtype
    s3 = topk_scores.reshape(B, 1, K).astype(jnp.float32)
    c3 = topk_classes.reshape(B, 1, K).astype(jnp.float32)
    y3 = topk_ys.reshape(B, 1, K).astype(jnp.int32)
    x3 = topk_xs.reshape(B, 1, K).astype(jnp.int32)
    kern = functools.partial(_select_decode_kernel, H=H,
                             stride=float(stride),
                             score_thresh=float(score_thresh))
    packed = pl.pallas_call(
        kern,
        out_shape=jax.ShapeDtypeStruct((B, 8, M), jnp.float32),
        grid=(B,),
        in_specs=[pl.BlockSpec((1, 4 * H, W), lambda bb: (bb, 0, 0)),
                  pl.BlockSpec((1, 1, K), lambda bb: (bb, 0, 0)),
                  pl.BlockSpec((1, 1, K), lambda bb: (bb, 0, 0)),
                  pl.BlockSpec((1, 1, K), lambda bb: (bb, 0, 0)),
                  pl.BlockSpec((1, 1, K), lambda bb: (bb, 0, 0))],
        out_specs=pl.BlockSpec((1, 8, M), lambda bb: (bb, 0, 0)),
        compiler_params=pltpu.CompilerParams(dimension_semantics=("parallel",)),
    )(wh_r, s3, c3, y3, x3)
    batch_scores = packed[:, 0, :]                         # (B, M)
    batch_classes = packed[:, 1, :]                        # (B, M)
    batch_bboxes = jnp.transpose(packed[:, 2:6, :], (0, 2, 1))   # (B, M, 4)
    return batch_scores, batch_classes, batch_bboxes


# ---------------------------------------------------------------------------
# Decoder driver
# ---------------------------------------------------------------------------
class TTFNetDecoderPallas:
    def __init__(self, topk=100, stride=4, min_score_threshold=0.05,
                 max_object_num=100):
        self.topk = topk
        self.stride = stride
        self.min_score_threshold = min_score_threshold
        self.max_object_num = max_object_num

    def _get_topk(self, heatmap, K):
        # TODO(synk): a full sorted top-k has no clean Pallas equivalent; done
        # with jax.lax.top_k glue (same semantics as torch.topk, descending).
        B, C, H, W = heatmap.shape
        flat = heatmap.reshape(B, C, H * W)
        per_cls_scores, per_cls_idxs = lax.top_k(flat, K)              # (B,C,K)
        top_scores, top_sel = lax.top_k(per_cls_scores.reshape(B, C * K), K)
        top_classes = (top_sel // K).astype(jnp.int32)                 # (B,K)
        idxs_flat = per_cls_idxs.reshape(B, C * K)
        top_idxs = jnp.take_along_axis(idxs_flat, top_sel, axis=1)     # (B,K)
        top_ys = (top_idxs // W).astype(jnp.int32)
        top_xs = (top_idxs % W).astype(jnp.int32)
        return top_scores, top_classes, top_ys, top_xs

    def __call__(self, preds):
        heatmap_heads, wh_heads = preds

        # 1) 3x3 max-pool NMS keep-mask (Pallas kernel A)
        hm_nms = nms_heatmap(heatmap_heads)
        # TODO(synk): biggest remaining win (esp. v5e) is fusing a per-tile
        # partial top-K into kernel A so only (B, C/c_tile, K) candidates go
        # back to HBM; kept in JAX glue to preserve exact f32 topk ordering.

        # 2) top-k over classes/positions (JAX glue)
        topk_scores, topk_classes, topk_ys, topk_xs = self._get_topk(
            hm_nms, self.topk)

        # 3) fused gather + ltrb decode + threshold + prefix fill (kernel B)
        return select_decode(wh_heads, topk_scores, topk_classes,
                             topk_ys, topk_xs, self.stride,
                             self.min_score_threshold, self.max_object_num)


# ---------------------------------------------------------------------------
# Pure-JAX reference (mirrors the torch module) for a sanity check
# ---------------------------------------------------------------------------
def _reference(heatmap, wh, topk, stride, thresh, max_obj):
    B, C, H, W = heatmap.shape
    hmax = lax.reduce_window(heatmap, -jnp.inf, lax.max,
                             (1, 1, 3, 3), (1, 1, 1, 1),
                             ((0, 0), (0, 0), (1, 1), (1, 1)))
    hm = heatmap * (hmax == heatmap).astype(heatmap.dtype)
    flat = hm.reshape(B, C, H * W)
    pcs, pci = lax.top_k(flat, topk)
    ts, tsel = lax.top_k(pcs.reshape(B, C * topk), topk)
    tcls = (tsel // topk).astype(jnp.float32)
    tidx = jnp.take_along_axis(pci.reshape(B, C * topk), tsel, axis=1)
    tys = (tidx // W).astype(jnp.float32)
    txs = (tidx % W).astype(jnp.float32)
    whf = wh.reshape(B, 4, H * W).astype(jnp.float32)
    g = jnp.take_along_axis(whf, jnp.broadcast_to(tidx[:, None, :], (B, 4, topk)),
                            axis=2)                                     # (B,4,K)
    l, t, r, b = g[:, 0], g[:, 1], g[:, 2], g[:, 3]
    x1 = jnp.trunc((txs - jnp.exp(l)) * stride)
    y1 = jnp.trunc((tys - jnp.exp(t)) * stride)
    x2 = jnp.trunc((txs + jnp.exp(r)) * stride)
    y2 = jnp.trunc((tys + jnp.exp(b)) * stride)
    boxes = jnp.stack([x1, y1, x2, y2], axis=-1)                        # (B,K,4)
    mask = ts > thresh
    out_s = jnp.where(mask, ts, -1.0)[:, :max_obj]
    out_c = jnp.where(mask, tcls, -1.0)[:, :max_obj]
    out_b = jnp.where(mask[..., None], boxes, 0.0)[:, :max_obj]
    return out_s, out_c, out_b


if __name__ == "__main__":
    key = jax.random.PRNGKey(0)
    k1, k2 = jax.random.split(key)
    B, C, H, W = 2, 4, 16, 16        # batch=2, num_classes=4, 16x16 feature map
    heatmap = jax.nn.sigmoid(jax.random.normal(k1, (B, C, H, W), jnp.float32))
    wh = 0.5 * jax.random.normal(k2, (B, 4, H, W), jnp.float32)

    decoder = TTFNetDecoderPallas(topk=8, stride=4,
                                  min_score_threshold=0.05, max_object_num=8)
    scores, classes, bboxes = decoder((heatmap, wh))
    jax.block_until_ready((scores, classes, bboxes))

    assert scores.shape == (B, 8)
    assert classes.shape == (B, 8)
    assert bboxes.shape == (B, 8, 4)
    assert scores.dtype == jnp.float32 and bboxes.dtype == jnp.float32

    ref_s, ref_c, ref_b = _reference(heatmap, wh, 8, 4, 0.05, 8)
    assert np.allclose(np.asarray(scores), np.asarray(ref_s), atol=1e-6)
    assert np.allclose(np.asarray(classes), np.asarray(ref_c), atol=1e-6)
    assert np.allclose(np.asarray(bboxes), np.asarray(ref_b), atol=1.001)

    # (PyTorch module returns numpy; equivalent here:)
    _ = (np.asarray(scores), np.asarray(classes), np.asarray(bboxes))
    print("KERNEL_OK")
</pallas_src>

<mosaic_0001>
module attributes {stable_mosaic.version = 11 : i64} {
  func.func @_nms_kernel(%arg0: i32, %arg1: i32, %arg2: memref<1x32x16xf32, #tpu.memory_space<vmem>>, %arg3: memref<1x32x16xf32, #tpu.memory_space<vmem>>) attributes {dimension_semantics = [#tpu.dimension_semantics<parallel>, #tpu.dimension_semantics<parallel>], iteration_bounds = array<i64: 2, 2>, scalar_prefetch = 0 : i64, scratch_operands = 0 : i64, tpu.core_type = #tpu.core_type<tc>, window_params = [{transform_indices = @transform_0, window_bounds = array<i64: 1, 32, 16>}, {transform_indices = @transform_1, window_bounds = array<i64: 1, 32, 16>}]} {
    %c0 = arith.constant 0 : index
    %c0_0 = arith.constant 0 : index
    %c0_1 = arith.constant 0 : index
    %0 = vector.load %arg2[%c0, %c0_0, %c0_1] : memref<1x32x16xf32, #tpu.memory_space<vmem>>, vector<1x32x16xf32>
    %1 = vector.shape_cast %0 : vector<1x32x16xf32> to vector<32x16xf32>
    %2 = tpu.iota {dimensions = array<i32: 1>} : vector<1x16xi32>
    %3 = tpu.iota {dimensions = array<i32: 0>} : vector<32x1xi32>
    %c16_i32 = arith.constant 16 : i32
    %c0_i32 = arith.constant 0 : i32
    %4 = arith.cmpi eq, %c16_i32, %c0_i32 : i32
    %c1_i32 = arith.constant 1 : i32
    %5 = arith.select %4, %c1_i32, %c16_i32 : i32
    %6 = vector.broadcast %5 : i32 to vector<32x1xi32>
    %7 = arith.remsi %3, %6 : vector<32x1xi32>
    %c0_i32_2 = arith.constant 0 : i32
    %8 = vector.broadcast %c0_i32_2 : i32 to vector<32x1xi32>
    %9 = arith.cmpi ne, %7, %8 : vector<32x1xi32>
    %c0_i32_3 = arith.constant 0 : i32
    %10 = vector.broadcast %c0_i32_3 : i32 to vector<32x1xi32>
    %11 = arith.cmpi slt, %7, %10 : vector<32x1xi32>
    %c0_i32_4 = arith.constant 0 : i32
    %12 = arith.cmpi slt, %5, %c0_i32_4 : i32
    %13 = vector.broadcast %12 : i1 to vector<32x1xi1>
    %14 = vector.broadcast %13 : vector<32x1xi1> to vector<32x1xi1>
    %15 = arith.xori %11, %14 : vector<32x1xi1>
    %16 = arith.andi %15, %9 : vector<32x1xi1>
    %17 = vector.broadcast %5 : i32 to vector<32x1xi32>
    %18 = arith.addi %7, %17 : vector<32x1xi32>
    %19 = arith.select %16, %18, %7 : vector<32x1xi1>, vector<32x1xi32>
    %c0_i32_5 = arith.constant 0 : i32
    %20 = vector.broadcast %c0_i32_5 : i32 to vector<1x16xi32>
    %21 = arith.cmpi eq, %2, %20 : vector<1x16xi32>
    %c1_i32_6 = arith.constant 1 : i32
    %22 = tpu.dynamic_rotate %1 by %c1_i32_6 dim 1 : vector<32x16xf32>, i32 -> vector<32x16xf32>
    %cst = arith.constant 0xFF800000 : f32
    %23 = vector.shape_cast %21 : vector<1x16xi1> to vector<1x16xi1>
    %24 = vector.broadcast %23 : vector<1x16xi1> to vector<32x16xi1>
    %25 = vector.broadcast %cst : f32 to vector<32x16xf32>
    %26 = arith.select %24, %25, %22 : vector<32x16xi1>, vector<32x16xf32>
    %c15_i32 = arith.constant 15 : i32
    %27 = vector.broadcast %c15_i32 : i32 to vector<1x16xi32>
    %28 = arith.cmpi eq, %2, %27 : vector<1x16xi32>
    %c15_i32_7 = arith.constant 15 : i32
    %29 = tpu.dynamic_rotate %1 by %c15_i32_7 dim 1 : vector<32x16xf32>, i32 -> vector<32x16xf32>
    %cst_8 = arith.constant 0xFF800000 : f32
    %30 = vector.shape_cast %28 : vector<1x16xi1> to vector<1x16xi1>
    %31 = vector.broadcast %30 : vector<1x16xi1> to vector<32x16xi1>
    %32 = vector.broadcast %cst_8 : f32 to vector<32x16xf32>
    %33 = arith.select %31, %32, %29 : vector<32x16xi1>, vector<32x16xf32>
    %34 = arith.maximumf %26, %33 : vector<32x16xf32>
    %35 = arith.maximumf %34, %1 : vector<32x16xf32>
    %c0_i32_9 = arith.constant 0 : i32
    %36 = vector.broadcast %c0_i32_9 : i32 to vector<32x1xi32>
    %37 = arith.cmpi eq, %19, %36 : vector<32x1xi32>
    %c1_i32_10 = arith.constant 1 : i32
    %38 = tpu.dynamic_rotate %35 by %c1_i32_10 dim 0 : vector<32x16xf32>, i32 -> vector<32x16xf32>
    %cst_11 = arith.constant 0xFF800000 : f32
    %39 = vector.shape_cast %37 : vector<32x1xi1> to vector<32x1xi1>
    %40 = vector.broadcast %39 : vector<32x1xi1> to vector<32x16xi1>
    %41 = vector.broadcast %cst_11 : f32 to vector<32x16xf32>
    %42 = arith.select %40, %41, %38 : vector<32x16xi1>, vector<32x16xf32>
    %c15_i32_12 = arith.constant 15 : i32
    %43 = vector.broadcast %c15_i32_12 : i32 to vector<32x1xi32>
    %44 = arith.cmpi eq, %19, %43 : vector<32x1xi32>
    %c31_i32 = arith.constant 31 : i32
    %45 = tpu.dynamic_rotate %35 by %c31_i32 dim 0 : vector<32x16xf32>, i32 -> vector<32x16xf32>
    %cst_13 = arith.constant 0xFF800000 : f32
    %46 = vector.shape_cast %44 : vector<32x1xi1> to vector<32x1xi1>
    %47 = vector.broadcast %46 : vector<32x1xi1> to vector<32x16xi1>
    %48 = vector.broadcast %cst_13 : f32 to vector<32x16xf32>
    %49 = arith.select %47, %48, %45 : vector<32x16xi1>, vector<32x16xf32>
    %50 = arith.maximumf %42, %49 : vector<32x16xf32>
    %51 = arith.maximumf %50, %35 : vector<32x16xf32>
    %52 = arith.cmpf oeq, %51, %1 : vector<32x16xf32>
    %53 = arith.extui %52 : vector<32x16xi1> to vector<32x16xi32>
    %54 = arith.sitofp %53 : vector<32x16xi32> to vector<32x16xf32>
    %55 = arith.mulf %1, %54 : vector<32x16xf32>
    %c0_14 = arith.constant 0 : index
    %c0_15 = arith.constant 0 : index
    %c0_16 = arith.constant 0 : index
    %56 = vector.load %arg3[%c0_14, %c0_15, %c0_16] : memref<1x32x16xf32, #tpu.memory_space<vmem>>, vector<1x32x16xf32>
    %57 = vector.shape_cast %56 : vector<1x32x16xf32> to vector<32x16xf32>
    %58 = vector.shape_cast %55 : vector<32x16xf32> to vector<1x32x16xf32>
    tpu.vector_store %arg3[%c0_14, %c0_15, %c0_16], %58 {strides = array<i32>} : memref<1x32x16xf32, #tpu.memory_space<vmem>>, vector<1x32x16xf32>,
    return
  }
  func.func @transform_0(%arg0: i32, %arg1: i32) -> (i32, i32, i32) {
    %c0_i32 = arith.constant 0 : i32
    %c0_i32_0 = arith.constant 0 : i32
    return %arg0, %arg1, %c0_i32 : i32, i32, i32
  }
  func.func @transform_1(%arg0: i32, %arg1: i32) -> (i32, i32, i32) {
    %c0_i32 = arith.constant 0 : i32
    %c0_i32_0 = arith.constant 0 : i32
    return %arg0, %arg1, %c0_i32 : i32, i32, i32
  }
}

</mosaic_0001>

<llo_original>
// kernel: tpu_custom_call.1
$region0: #{tpu_custom_call.1}
  #allocation0 [shape = 'u32[]', space=smem, size = 0x4, offset = 0x4, fixed_abs, tag = 'smem constant byte address 0x4 - core index']
  #allocation1 [shape = 'u32[144,128]{1,0:T(1,128)}', space=vmem, size = 0x12000, scoped, tag = 'internal scratch']
  %s0 = inlined_call_operand.vmem [shape: f32[2,64,16], index: 0, kind: input, shape index: {}]
  %s1 = inlined_call_operand.vmem [shape: f32[2,64,16], index: 1, kind: output, shape index: {}]
  %s2 = sld [smem:[#allocation0]]
  $region37: #{tpu_custom_call.1} parent=0
    _
  %s4 = ssub.s32 1, %s2
  %s5 = scalar_select 0, %s4, %s2
  loop: start=0, step=1, limit=6
  $region2: #{tpu_custom_call.1} parent=0 // loop_pre_header
    _
  $region3: #{tpu_custom_call.1} parent=0 // loop_header
    %s7 = sphi 0, %s11
    %p8 = scmp.ge.s32.totalorder %s7, 6
    %s14 = sphi 0, %s26
    %s15 = sphi 0, %s22
    %s16 = sphi 0, %s14
    %s17 = sphi 0, %s15
    %s18 = sphi 0, %s16
    %s19 = sphi 0, %s17
    %s31 = sphi 0, %s33
    %s34 = sphi 0, %s31
    %s35 = sphi 0, %s34
    %s51 = sphi 0, %s35
    %s59 = sphi 0, %s61
    %s62 = sphi 0, %s59
    %s63 = sphi 0, %s62
    %s79 = sphi 0, %s63
  $region4: #{tpu_custom_call.1} parent=0 // loop_header_branch
    %10 = sbr.rel (%p8) target = $region8
  $region5: #{tpu_custom_call.1} parent=0 // loop_body
    %s12 = ssub.s32 %s7, 1
    %s13 = ssub.s32 %s7, 2
    %s20 = sadd.s32 1, %s15
    %p21 = scmp.ge.s32.totalorder %s20, 2
    %s22 = scalar_select %p21, 0, %s20
    %s23 = sadd.s32 1, %s14
    %s24 = scalar_select %p21, %s23, %s14
    %p25 = scmp.ge.s32.totalorder %s24, 2
    %s26 = scalar_select %p25, 0, %s24
    %s27 = ssub.s32 %s14, %s26
    %s28 = ssub.s32 %s15, %s22
    %s29 = sor.u32 %s27, %s28
    %p30 = scmp.eq.s32.totalorder %s29, 0
    %s32 = sadd.s32 %s31, 1
    %s33 = scalar_select %p30, %s31, %s32
    %p36 = pneg %p30
    %p37 = scmp.eq.s32.totalorder %s7, 3
    %p38 = por %p36, %p37
    %p39 = scmp.ne.s32.totalorder %s31, %s34
    %p40 = scmp.eq.s32.totalorder %s7, 0
    %p41 = por %p39, %p40
    %p42 = scmp.ne.s32.totalorder %s31, %s34
    %p43 = scmp.eq.s32.totalorder %s12, 3
    %p44 = por %p42, %p43
    %p45 = scmp.ne.s32.totalorder %s34, %s35
    %p46 = scmp.eq.s32.totalorder %s12, 0
    %p47 = por %p45, %p46
    %p48 = scmp.ne.s32.totalorder %s34, %s35
    %p49 = scmp.eq.s32.totalorder %s13, 3
    %p50 = por %p48, %p49
    %p52 = scmp.ne.s32.totalorder %s35, %s51
    %p53 = scmp.eq.s32.totalorder %s13, 0
    %p54 = por %p52, %p53
    %s55 = ssub.s32 %s14, %s26
    %s56 = ssub.s32 %s15, %s22
    %s57 = sor.u32 %s55, %s56
    %p58 = scmp.eq.s32.totalorder %s57, 0
    %s60 = sadd.s32 %s59, 1
    %s61 = scalar_select %p58, %s59, %s60
    %p64 = pneg %p58
    %p65 = scmp.eq.s32.totalorder %s7, 3
    %p66 = por %p64, %p65
    %p67 = scmp.ne.s32.totalorder %s59, %s62
    %p68 = scmp.eq.s32.totalorder %s7, 0
    %p69 = por %p67, %p68
    %p70 = scmp.ne.s32.totalorder %s59, %s62
    %p71 = scmp.eq.s32.totalorder %s12, 3
    %p72 = por %p70, %p71
    %p73 = scmp.ne.s32.totalorder %s62, %s63
    %p74 = scmp.eq.s32.totalorder %s12, 0
    %p75 = por %p73, %p74
    %p76 = scmp.ne.s32.totalorder %s62, %s63
    %p77 = scmp.eq.s32.totalorder %s13, 3
    %p78 = por %p76, %p77
    %p80 = scmp.ne.s32.totalorder %s63, %s79
    %p81 = scmp.eq.s32.totalorder %s13, 0
    %p82 = por %p80, %p81
    %p83 = scmp.le.s32.totalorder 1, %s7
    %p84 = scmp.lt.s32.totalorder %s7, 5
    %p85 = pnand %p83, %p84
    %p86 = pneg %p85
    // Predicated region
    $region9: #{tpu_custom_call.1} parent=5 // pred_check
      _
    $region10: #{tpu_custom_call.1} parent=5 // pred_check_branch
      %88 = sbr.rel (%p85) target = $region12
    $region11: #{tpu_custom_call.1} parent=5 // pred_region
      %s89 = ssub.s32 %s7, 1
    $region12: #{tpu_custom_call.1} parent=5 // pred_fallthru
      _
    %p90 = scmp.lt.s32.totalorder %s7, 4
    // Predicated region
    $region13: #{tpu_custom_call.1} parent=5 // pred_check
      %p91 = pneg %p90
    $region14: #{tpu_custom_call.1} parent=5 // pred_check_branch
      %93 = sbr.rel (%p91) target = $region16
    $region15: #{tpu_custom_call.1} parent=5 // pred_region
      // Predicated region
      $region17: #{tpu_custom_call.1} parent=15 // pred_check
        %p94 = pneg %p41
      $region18: #{tpu_custom_call.1} parent=15 // pred_check_branch
        %96 = sbr.rel (%p94) target = $region20
      $region19: #{tpu_custom_call.1} parent=15 // pred_region
        %s97 = smul.u32 4, %s15
        %p98 = scmp.lt.s32.totalorder %s14, 1
        %s99 = scalar_select %p98, %s14, 1
        %p100 = scmp.lt.s32.totalorder %s97, 7
        %s101 = scalar_select %p100, %s97, 7
        %s102 = smul.addr %s99, 8
        %s103 = sadd.s32 %s101, %s102
        %s104 = smul.addr %s103, 8
        %s105 = scalar_lea.vmem %s0, %s104
        %s106 = smul.u32 4, %s15
      $region20: #{tpu_custom_call.1} parent=15 // pred_fallthru
        _
    $region16: #{tpu_custom_call.1} parent=5 // pred_fallthru
      _
    %p107 = scmp.le.s32.totalorder 1, %s7
    %p108 = scmp.lt.s32.totalorder %s7, 5
    %p109 = pnand %p107, %p108
    %p110 = pneg %p109
    // Predicated region
    $region21: #{tpu_custom_call.1} parent=5 // pred_check
      _
    $region22: #{tpu_custom_call.1} parent=5 // pred_check_branch
      %112 = sbr.rel (%p109) target = $region24
    $region23: #{tpu_custom_call.1} parent=5 // pred_region
      %s113 = ssub.s32 %s7, 1
      %s114 = smul.u32 4, %s17
      %p115 = scmp.lt.s32.totalorder %s16, 1
      %s116 = scalar_select %p115, %s16, 1
      %p117 = scmp.lt.s32.totalorder %s114, 7
      %s118 = scalar_select %p117, %s114, 7
      %s119 = smul.addr %s116, 8
      %s120 = sadd.s32 %s118, %s119
      %s121 = smul.addr %s120, 8
      %s122 = scalar_lea.vmem %s0, %s121
      %p123 = pneg %p47
      %p124 = pneg %p44
      %p125 = pneg %p75
      %p126 = pneg %p72
      %s127 = smul.u32 4, %s17
      %p128 = scmp.lt.s32.totalorder %s16, 1
      %s129 = scalar_select %p128, %s16, 1
      %p130 = scmp.lt.s32.totalorder %s127, 7
      %s131 = scalar_select %p130, %s127, 7
      %s132 = smul.addr %s129, 8
      %s133 = sadd.s32 %s131, %s132
      %s134 = smul.addr %s133, 8
      %s135 = scalar_lea.vmem %s1, %s134
      %s136 = smul.u32 4, %s17
      %p137 = scmp.lt.s32.totalorder %s16, 1
      %s138 = scalar_select %p137, %s16, 1
      %p139 = scmp.lt.s32.totalorder %s136, 7
      %s140 = scalar_select %p139, %s136, 7
      %s141 = smul.addr %s138, 8
      %s142 = sadd.s32 %s140, %s141
      %s143 = smul.addr %s142, 8
      %s144 = scalar_lea.vmem %s0, %s143
      %s145 = smul.u32 4, %s17
      %s146 = smul.u32 4, %s17
      %p147 = scmp.lt.s32.totalorder %s16, 1
      %s148 = scalar_select %p147, %s16, 1
      %p149 = scmp.lt.s32.totalorder %s146, 7
      %s150 = scalar_select %p149, %s146, 7
      %s151 = smul.addr %s148, 8
      %s152 = sadd.s32 %s150, %s151
      %s153 = smul.addr %s152, 8
      %s154 = scalar_lea.vmem %s1, %s153
      %s155 = smul.u32 4, %s17
      %v156 = vld [vmem:[%s144] sm:$0xff]
      %v157 = vld [vmem:[%s144 + $0x8] sm:$0xff]
      %v158 = vld [vmem:[%s144 + $0x10] sm:$0xff]
      %v159 = vld [vmem:[%s144 + $0x18] sm:$0xff]
      %v160 = vlaneseq
      %v161 = vand.u32 %v160, 127
      %v162 = vlaneseq
      %v163 = vshrl.u32 %v162, 7
      %v164 = vadd.s32 %v163, 8
      %v165 = vadd.s32 %v163, 16
      %v166 = vadd.s32 %v163, 24
      %vm167 = vcmp.lt.s32.totalorder %v163, 0
      %v168 = vsub.s32 0, %v163
      %v169 = vsel %vm167, %v168, %v163
      %v170 = vshrl.u32 %v169, 4
      %v171 = vand.u32 %v169, 15
      %v172 = vsub.s32 0, %v171
      %v173 = vsel %vm167, %v172, %v171
      %vm174 = vcmp.lt.s32.totalorder %v164, 0
      %v175 = vsub.s32 0, %v164
      %v176 = vsel %vm174, %v175, %v164
      %v177 = vshrl.u32 %v176, 4
      %v178 = vand.u32 %v176, 15
      %v179 = vsub.s32 0, %v178
      %v180 = vsel %vm174, %v179, %v178
      %vm181 = vcmp.lt.s32.totalorder %v165, 0
      %v182 = vsub.s32 0, %v165
      %v183 = vsel %vm181, %v182, %v165
      %v184 = vshrl.u32 %v183, 4
      %v185 = vand.u32 %v183, 15
      %v186 = vsub.s32 0, %v185
      %v187 = vsel %vm181, %v186, %v185
      %vm188 = vcmp.lt.s32.totalorder %v166, 0
      %v189 = vsub.s32 0, %v166
      %v190 = vsel %vm188, %v189, %v166
      %v191 = vshrl.u32 %v190, 4
      %v192 = vand.u32 %v190, 15
      %v193 = vsub.s32 0, %v192
      %v194 = vsel %vm188, %v193, %v192
      %vm195 = vcmp.ne.s32.totalorder %v173, 0
      %vm196 = vcmp.ne.s32.totalorder %v180, 0
      %vm197 = vcmp.ne.s32.totalorder %v187, 0
      %vm198 = vcmp.ne.s32.totalorder %v194, 0
      %vm199 = vcmp.lt.s32.totalorder %v173, 0
      %vm200 = vcmp.lt.s32.totalorder %v180, 0
      %vm201 = vcmp.lt.s32.totalorder %v187, 0
      %vm202 = vcmp.lt.s32.totalorder %v194, 0
      %vm203 = vmand %vm199, %vm195
      %vm204 = vmand %vm200, %vm196
      %vm205 = vmand %vm201, %vm197
      %vm206 = vmand %vm202, %vm198
      %v207 = vadd.s32 %v173, 16
      %v208 = vadd.s32 %v180, 16
      %v209 = vadd.s32 %v187, 16
      %v210 = vadd.s32 %v194, 16
      %v211 = vsel %vm203, %v207, %v173
      %v212 = vsel %vm204, %v208, %v180
      %v213 = vsel %vm205, %v209, %v187
      %v214 = vsel %vm206, %v210, %v194
      %vm215 = vcmp.eq.s32.totalorder %v161, 0
      %vm216 = vcmask 1047680
      %217 = vrot.lane.b32.xlu0 %v156, 16
      %v218 = vpop.permute.xlu0 %217
      %v219 = vsel %vm216, %v218, %v156
      %220 = vrot.lane.b32.xlu0 %v157, 16
      %v221 = vpop.permute.xlu0 %220
      %v222 = vsel %vm216, %v221, %v157
      %223 = vrot.lane.b32.xlu0 %v158, 16
      %v224 = vpop.permute.xlu0 %223
      %v225 = vsel %vm216, %v224, %v158
      %226 = vrot.lane.b32.xlu0 %v159, 16
      %v227 = vpop.permute.xlu0 %226
      %v228 = vsel %vm216, %v227, %v159
      %229 = vrot.lane.b32.xlu0 %v219, 16
      %v230 = vpop.permute.xlu0 %229
      %231 = vrot.lane.b32.xlu0 %v222, 16
      %v232 = vpop.permute.xlu0 %231
      %233 = vrot.lane.b32.xlu0 %v225, 16
      %v234 = vpop.permute.xlu0 %233
      %235 = vrot.lane.b32.xlu0 %v228, 16
      %v236 = vpop.permute.xlu0 %235
      %v237 = vsel %vm216, %v230, %v156
      %v238 = vsel %vm216, %v232, %v157
      %v239 = vsel %vm216, %v234, %v158
      %v240 = vsel %vm216, %v236, %v159
      %v241 = vsel %vm215, 1, 0
      %vm242 = vcmp.eq.s32.totalorder %v241, 1
      %247 = vrot.lane.b32.xlu0 %v237, 113
      %v248 = vpop.permute.xlu0 %247
      %249 = vrot.lane.b32.xlu0 %v238, 113
      %v250 = vpop.permute.xlu0 %249
      %251 = vrot.lane.b32.xlu0 %v239, 113
      %v252 = vpop.permute.xlu0 %251
      %253 = vrot.lane.b32.xlu0 %v240, 113
      %v254 = vpop.permute.xlu0 %253
      %v259 = vsel %vm242, -inf, %v248
      %v260 = vsel %vm242, -inf, %v250
      %v261 = vsel %vm242, -inf, %v252
      %v262 = vsel %vm242, -inf, %v254
      %vm263 = vcmp.eq.s32.totalorder %v161, 15
      %v264 = vsel %vm263, 1, 0
      %vm265 = vcmp.eq.s32.totalorder %v264, 1
      %266 = vrot.lane.b32.xlu0 %v237, 127
      %v267 = vpop.permute.xlu0 %266
      %268 = vrot.lane.b32.xlu0 %v238, 127
      %v269 = vpop.permute.xlu0 %268
      %270 = vrot.lane.b32.xlu0 %v239, 127
      %v271 = vpop.permute.xlu0 %270
      %272 = vrot.lane.b32.xlu0 %v240, 127
      %v273 = vpop.permute.xlu0 %272
      %v278 = vsel %vm265, -inf, %v267
      %v279 = vsel %vm265, -inf, %v269
      %v280 = vsel %vm265, -inf, %v271
      %v281 = vsel %vm265, -inf, %v273
      %v282 = vmax.f32 %v259, %v278
      %v283 = vmax.f32 %v260, %v279
      %v284 = vmax.f32 %v261, %v280
      %v285 = vmax.f32 %v262, %v281
      %v286 = vmax.f32 %v282, %v156
      %v287 = vmax.f32 %v283, %v157
      %v288 = vmax.f32 %v284, %v158
      %v289 = vmax.f32 %v285, %v159
      %vm290 = vcmp.eq.s32.totalorder %v211, 0
      %vm291 = vcmp.eq.s32.totalorder %v212, 0
      %vm292 = vcmp.eq.s32.totalorder %v213, 0
      %vm293 = vcmp.eq.s32.totalorder %v214, 0
      %v294 = vrot.slane %v286, 7
      %v295 = vrot.slane %v287, 7
      %v296 = vrot.slane %v288, 7
      %v297 = vrot.slane %v289, 7
      %vm298 = vcmp.lt.s32.totalorder %v163, 1
      %v299 = vsel %vm298, %v296, %v297
      %v300 = vsel %vm298, %v295, %v296
      %v301 = vsel %vm298, %v294, %v295
      %v302 = vsel %vm298, %v297, %v294
      %v303 = vsel %vm290, 1, 0
      %v304 = vsel %vm291, 1, 0
      %v305 = vsel %vm292, 1, 0
      %v306 = vsel %vm293, 1, 0
      %vm307 = vcmp.eq.s32.totalorder %v303, 1
      %vm308 = vcmp.eq.s32.totalorder %v304, 1
      %vm309 = vcmp.eq.s32.totalorder %v305, 1
      %vm310 = vcmp.eq.s32.totalorder %v306, 1
      %v311 = vsel %vm307, -inf, %v302
      %v312 = vsel %vm308, -inf, %v301
      %v313 = vsel %vm309, -inf, %v300
      %v314 = vsel %vm310, -inf, %v299
      %vm315 = vcmp.eq.s32.totalorder %v211, 15
      %vm316 = vcmp.eq.s32.totalorder %v212, 15
      %vm317 = vcmp.eq.s32.totalorder %v213, 15
      %vm318 = vcmp.eq.s32.totalorder %v214, 15
      %v319 = vrot.slane %v286, 1
      %v320 = vrot.slane %v287, 1
      %v321 = vrot.slane %v288, 1
      %v322 = vrot.slane %v289, 1
      %vm323 = vcmp.lt.s32.totalorder %v163, 7
      %v324 = vsel %vm323, %v321, %v322
      %v325 = vsel %vm323, %v320, %v321
      %v326 = vsel %vm323, %v319, %v320
      %v327 = vsel %vm323, %v322, %v319
      %v328 = vsel %vm315, 1, 0
      %v329 = vsel %vm316, 1, 0
      %v330 = vsel %vm317, 1, 0
      %v331 = vsel %vm318, 1, 0
      %vm332 = vcmp.eq.s32.totalorder %v328, 1
      %vm333 = vcmp.eq.s32.totalorder %v329, 1
      %vm334 = vcmp.eq.s32.totalorder %v330, 1
      %vm335 = vcmp.eq.s32.totalorder %v331, 1
      %v336 = vsel %vm332, -inf, %v326
      %v337 = vsel %vm333, -inf, %v325
      %v338 = vsel %vm334, -inf, %v324
      %v339 = vsel %vm335, -inf, %v327
      %v340 = vmax.f32 %v311, %v336
      %v341 = vmax.f32 %v312, %v337
      %v342 = vmax.f32 %v313, %v338
      %v343 = vmax.f32 %v314, %v339
      %v344 = vmax.f32 %v340, %v286
      %v345 = vmax.f32 %v341, %v287
      %v346 = vmax.f32 %v342, %v288
      %v347 = vmax.f32 %v343, %v289
      %vm348 = vcmp.eq.f32.partialorder %v344, %v156
      %vm349 = vcmp.eq.f32.partialorder %v345, %v157
      %vm350 = vcmp.eq.f32.partialorder %v346, %v158
      %vm351 = vcmp.eq.f32.partialorder %v347, %v159
      %v352 = vsel %vm348, 1, 0
      %v353 = vsel %vm349, 1, 0
      %v354 = vsel %vm350, 1, 0
      %v355 = vsel %vm351, 1, 0
      %v356 = vcvt.s32.f32 %v352
      %v357 = vcvt.s32.f32 %v353
      %v358 = vcvt.s32.f32 %v354
      %v359 = vcvt.s32.f32 %v355
      %v360 = vmul.f32 %v156, %v356
      %v361 = vmul.f32 %v157, %v357
      %v362 = vmul.f32 %v158, %v358
      %v363 = vmul.f32 %v159, %v359
      %vm364 = vcmask 130048
      %365 = vst.msk [vmem:[%s154] sm:$0xff] %vm364, %v360
      %366 = vst.msk [vmem:[%s154 + $0x8] sm:$0xff] %vm364, %v361
      %367 = vst.msk [vmem:[%s154 + $0x10] sm:$0xff] %vm364, %v362
      %368 = vst.msk [vmem:[%s154 + $0x18] sm:$0xff] %vm364, %v363
      %s369 = smul.u32 4, %s17
      %p370 = scmp.lt.s32.totalorder %s16, 1
      %s371 = scalar_select %p370, %s16, 1
      %p372 = scmp.lt.s32.totalorder %s369, 7
      %s373 = scalar_select %p372, %s369, 7
      %s374 = smul.addr %s371, 8
      %s375 = sadd.s32 %s373, %s374
      %s376 = smul.addr %s375, 8
      %s377 = scalar_lea.vmem %s1, %s376
      // Predicated region
      $region25: #{tpu_custom_call.1} parent=23 // pred_check
        %p378 = pneg %p72
      $region26: #{tpu_custom_call.1} parent=23 // pred_check_branch
        %380 = sbr.rel (%p378) target = $region28
      $region27: #{tpu_custom_call.1} parent=23 // pred_region
        %s381 = smul.u32 4, %s17
      $region28: #{tpu_custom_call.1} parent=23 // pred_fallthru
        _
    $region24: #{tpu_custom_call.1} parent=5 // pred_fallthru
      _
    %p382 = scmp.le.s32.totalorder 2, %s7
    // Predicated region
    $region29: #{tpu_custom_call.1} parent=5 // pred_check
      %p383 = pneg %p382
    $region30: #{tpu_custom_call.1} parent=5 // pred_check_branch
      %385 = sbr.rel (%p383) target = $region32
    $region31: #{tpu_custom_call.1} parent=5 // pred_region
      %s386 = ssub.s32 %s7, 2
      // Predicated region
      $region33: #{tpu_custom_call.1} parent=31 // pred_check
        %p387 = pneg %p78
      $region34: #{tpu_custom_call.1} parent=31 // pred_check_branch
        %389 = sbr.rel (%p387) target = $region36
      $region35: #{tpu_custom_call.1} parent=31 // pred_region
        %s390 = smul.u32 4, %s19
        %p391 = scmp.lt.s32.totalorder %s18, 1
        %s392 = scalar_select %p391, %s18, 1
        %p393 = scmp.lt.s32.totalorder %s390, 7
        %s394 = scalar_select %p393, %s390, 7
        %s395 = smul.addr %s392, 8
        %s396 = sadd.s32 %s394, %s395
        %s397 = smul.addr %s396, 8
        %s398 = scalar_lea.vmem %s1, %s397
      $region36: #{tpu_custom_call.1} parent=31 // pred_fallthru
        _
    $region32: #{tpu_custom_call.1} parent=5 // pred_fallthru
      _
  $region6: #{tpu_custom_call.1} parent=0 // loop_footer
    %s11 = sadd.s32 1, %s7
  $region7: #{tpu_custom_call.1} parent=0 // loop_footer_branch
    %6 = sbr.rel target = $region3
  $region8: #{tpu_custom_call.1} parent=0 // loop_exit
    _

</llo_original>
